<compile_context>
chip_gen: v7x
topology: tpu7x:2x2x1
jax: 0.10.0
libtpu: 0.0.40
codegen_flags: <defaults>
</compile_context>

<pallas_src>
import jax
import jax.numpy as jnp
from jax import lax
from jax.experimental import pallas as pl
from jax.experimental.pallas import tpu as pltpu


def _round_up(x: int, m: int) -> int:
    return ((x + m - 1) // m) * m


def _vmem_capacity_bytes() -> int:
    try:
        return int(pltpu.get_tpu_info().vmem_capacity_bytes)
    except Exception:
        return 64 << 20  # conservative (v7x per-TC)


def _pick_inter_tile(I: int, target: int = 512) -> int:
    """Largest multiple-of-128 divisor of I that is <= target (else I itself)."""
    if I <= target:
        return I
    for d in range(target - target % 128, 0, -128):
        if d > 0 and I % d == 0:
            return d
    return I


# ----------------------------- Router kernel --------------------------------


def _router_kernel(x_ref, gate_t_ref, o_ref):
    # bf16 x (tm, H) @ bf16 gate_t (H, E) -> fp32 logits (tm, E).
    o_ref[...] = jnp.dot(x_ref[...], gate_t_ref[...],
                         preferred_element_type=jnp.float32)


def router_logits(x, gate_t, *, tile_m=512):
    T, H = x.shape
    E = gate_t.shape[1]
    tm = T if T <= tile_m else tile_m
    grid = (pl.cdiv(T, tm),)
    return pl.pallas_call(
        _router_kernel,
        out_shape=jax.ShapeDtypeStruct((T, E), jnp.float32),
        grid_spec=pltpu.PrefetchScalarGridSpec(
            num_scalar_prefetch=0,
            grid=grid,
            in_specs=[
                pl.BlockSpec((tm, H), lambda i: (i, 0)),
                pl.BlockSpec((H, E), lambda i: (0, 0)),
            ],
            out_specs=pl.BlockSpec((tm, E), lambda i: (i, 0)),
        ),
        compiler_params=pltpu.CompilerParams(
            dimension_semantics=("parallel",)),
    )(x, gate_t)


# ----------------------------- MoE grouped GEMM -------------------------------


def _moe_grouped_gemm_kernel(tile_eid_ref, tile_rows_ref,
                             x_ref, rw_ref, wgu_ref, wd_ref, o_ref, acc_ref):
    """(token tile t) x (expert eid[t]) x (intermediate chunk j).

    tile_eid_ref  : SMEM (num_tiles,) expert id owning each token tile
    tile_rows_ref : SMEM (num_tiles,) number of real rows per tile (0 => skip)
    x_ref         : VMEM (tm, H)   expert-sorted tokens, compute dtype
    rw_ref        : VMEM (tm, 1)   per-row routing weight (0 for padding rows)
    wgu_ref       : VMEM (H, 2*tn) interleaved [gate_j | up_j] chunk, bf16
    wd_ref        : VMEM (tn, H)   down-proj chunk, bf16
    o_ref         : VMEM (tm, H)   output tile (expert-sorted order), bf16
    acc_ref       : VMEM (tm, H)   fp32 accumulator across intermediate chunks
    """
    t = pl.program_id(0)
    j = pl.program_id(1)
    tn = wd_ref.shape[0]

    @pl.when(j == 0)
    def _init():
        acc_ref[...] = jnp.zeros_like(acc_ref)

    @pl.when(tile_rows_ref[t] > 0)
    def _compute():
        x = x_ref[...]                                              # (tm, H) bf16
        gu = jnp.dot(x, wgu_ref[...],
                     preferred_element_type=jnp.float32)            # (tm, 2*tn) fp32
        gate = gu[:, :tn]
        up = gu[:, tn:]
        # SiLU(gate) * up, scaled by routing weight on the (tm, tn) intermediate
        # (cheaper than scaling the (tm, H) output when I < H).
        inter = (gate * jax.nn.sigmoid(gate) * up) * rw_ref[...]    # (tm, tn) fp32
        acc_ref[...] += jnp.dot(inter.astype(wd_ref.dtype), wd_ref[...],
                                preferred_element_type=jnp.float32)  # (tm, H)

    @pl.when(j == pl.num_programs(1) - 1)
    def _write():
        o_ref[...] = acc_ref[...].astype(o_ref.dtype)


def moe_grouped_gemm(tile_expert, tile_rows, x_pad, rw_pad,
                     w_gate_up, w_down_t, *, token_tile, inter_tile, out_dtype):
    T_pad, H = x_pad.shape
    E, I, _ = w_down_t.shape
    tn = inter_tile
    assert T_pad % token_tile == 0
    assert I % tn == 0
    num_tiles = T_pad // token_tile
    num_ichunks = I // tn

    # Generation-aware VMEM budget: 2x every double-buffered block + fp32
    # accumulator scratch + fp32 intermediates + Mosaic internal scratch.
    w_isz = jnp.dtype(w_gate_up.dtype).itemsize
    blocks = 2 * (token_tile * H * x_pad.dtype.itemsize          # x
                  + token_tile * 128 * rw_pad.dtype.itemsize     # rw (lane-padded)
                  + H * 2 * tn * w_isz                           # gate+up chunk
                  + tn * H * w_isz                               # down chunk
                  + token_tile * H * jnp.dtype(out_dtype).itemsize)  # out
    scratch = token_tile * H * 4                                  # fp32 accumulator
    temps = token_tile * 3 * tn * 4                               # gu / inter fp32
    need = blocks + scratch + temps + (8 << 20)                   # + Mosaic headroom
    cap = _vmem_capacity_bytes()
    vmem_limit = int(min(max(need, 32 << 20), int(cap * 0.8)))

    return pl.pallas_call(
        _moe_grouped_gemm_kernel,
        out_shape=jax.ShapeDtypeStruct((T_pad, H), out_dtype),
        grid_spec=pltpu.PrefetchScalarGridSpec(
            num_scalar_prefetch=2,
            grid=(num_tiles, num_ichunks),
            in_specs=[
                pl.BlockSpec((token_tile, H), lambda t, j, eid, rows: (t, 0)),
                pl.BlockSpec((token_tile, 1), lambda t, j, eid, rows: (t, 0)),
                pl.BlockSpec((None, H, 2 * tn),
                             lambda t, j, eid, rows: (eid[t], 0, j)),
                pl.BlockSpec((None, tn, H),
                             lambda t, j, eid, rows: (eid[t], j, 0)),
            ],
            out_specs=pl.BlockSpec((token_tile, H),
                                   lambda t, j, eid, rows: (t, 0)),
            scratch_shapes=[pltpu.VMEM((token_tile, H), jnp.float32)],
        ),
        compiler_params=pltpu.CompilerParams(
            dimension_semantics=("parallel", "arbitrary"),
            vmem_limit_bytes=vmem_limit,
        ),
    )(tile_expert, tile_rows, x_pad, rw_pad, w_gate_up, w_down_t)


# ----------------------------- Module wrapper --------------------------------


class Qwen3MoeFusedGroupedGEMMBlockPallas:
    """JAX/Pallas equivalent of Qwen3MoeFusedGroupedGEMMBlock.forward."""

    def __init__(self, num_experts, top_k, hidden_size, moe_intermediate_size,
                 norm_topk_prob, gate, gate_up_proj, down_proj,
                 token_tile=256, inter_tile=None, compute_dtype=jnp.bfloat16):
        assert gate.shape == (num_experts, hidden_size)
        assert gate_up_proj.shape == (num_experts, 2 * moe_intermediate_size, hidden_size)
        assert down_proj.shape == (num_experts, hidden_size, moe_intermediate_size)
        assert token_tile % 16 == 0, "token_tile must be a multiple of 16"
        self.num_experts = num_experts
        self.top_k = top_k
        self.hidden_size = hidden_size
        self.moe_intermediate_size = moe_intermediate_size
        self.norm_topk_prob = norm_topk_prob
        self.token_tile = token_tile
        self.compute_dtype = compute_dtype

        I = moe_intermediate_size
        self.inter_tile = _pick_inter_tile(I) if inter_tile is None else inter_tile
        assert I % self.inter_tile == 0

        # Router gate pre-transposed to (H, E), stored in the bf16 compute dtype
        # (fp32 MXU matmul is a multi-pass path; top-k routing tolerates bf16).
        self.gate_t = jnp.asarray(gate).T.astype(compute_dtype)

        # Expert weights: split gate/up halves, pre-transpose to (E, H, I) /
        # (E, I, H), then re-merge gate/up into ONE (E, H, 2I) operand with an
        # interleaved per-chunk layout so each intermediate chunk j reads a
        # single contiguous (H, 2*tn) block [gate_j | up_j].
        gup = jnp.asarray(gate_up_proj)
        wg_t = gup[:, :I, :].transpose(0, 2, 1).astype(compute_dtype)       # (E, H, I)
        wu_t = gup[:, I:, :].transpose(0, 2, 1).astype(compute_dtype)       # (E, H, I)
        self.w_gate_t = wg_t
        self.w_up_t = wu_t
        tn = self.inter_tile
        nI = I // tn
        E = num_experts
        H = hidden_size
        self.w_gate_up = jnp.concatenate(
            [wg_t.reshape(E, H, nI, tn), wu_t.reshape(E, H, nI, tn)],
            axis=-1).reshape(E, H, 2 * I)                                     # (E, H, 2I) interleaved
        self.w_down_t = jnp.asarray(down_proj).transpose(0, 2, 1).astype(compute_dtype)  # (E, I, H)

    def run_router(self, x_c):
        logits = router_logits(x_c, self.gate_t)                              # (T, E) fp32
        probs = jax.nn.softmax(logits, axis=-1)
        routing_weights, selected_experts = lax.top_k(probs, self.top_k)      # (T, K)
        if self.norm_topk_prob:
            routing_weights = routing_weights / jnp.sum(
                routing_weights, axis=-1, keepdims=True)
        return logits, routing_weights, selected_experts

    def __call__(self, hidden_states):
        B, S, H = hidden_states.shape
        T = B * S
        K = self.top_k
        TK = T * K
        E = self.num_experts
        tm = self.token_tile
        x = hidden_states.reshape(T, H)
        x_c = x.astype(self.compute_dtype)

        logits, routing_weights, selected_experts = self.run_router(x_c)

        # --- routing indices + padded expert-aligned placement (XLA glue) ---
        # TODO(synk): fuse the row gather + top-k combine into the Pallas kernel
        # (scalar-prefetched per-row source indices / manual DMA gather) to
        # remove the remaining full-activation HBM passes.
        flat_experts = selected_experts.reshape(-1)                           # (TK,)
        counts = jnp.zeros((E,), jnp.int32).at[flat_experts].add(1)
        sort_idx = jnp.argsort(flat_experts, stable=True).astype(jnp.int32)   # (TK,)
        sorted_experts = flat_experts[sort_idx]

        group_starts = jnp.concatenate(
            [jnp.zeros((1,), jnp.int32), jnp.cumsum(counts)[:-1].astype(jnp.int32)])
        padded_counts = ((counts + tm - 1) // tm) * tm
        padded_ends = jnp.cumsum(padded_counts).astype(jnp.int32)
        padded_starts = padded_ends - padded_counts
        real_ends = padded_starts + counts

        ranks = jnp.arange(TK, dtype=jnp.int32) - group_starts[sorted_experts]
        dest = padded_starts[sorted_experts] + ranks                          # (TK,)

        T_pad = _round_up(TK, tm) + E * tm                                    # static bound
        num_tiles = T_pad // tm

        src_tokens = (sort_idx // K).astype(jnp.int32)
        # Scatter only small per-slot vectors; gather the (T_pad, H) activations.
        slot_src = jnp.zeros((T_pad,), jnp.int32).at[dest].set(
            src_tokens, unique_indices=True)
        rw_sorted = routing_weights.reshape(-1)[sort_idx].astype(jnp.float32)
        rw_pad = jnp.zeros((T_pad,), jnp.float32).at[dest].set(
            rw_sorted, unique_indices=True).reshape(T_pad, 1)
        x_pad = x_c[slot_src]                                                 # (T_pad, H)

        tile_starts = jnp.arange(num_tiles, dtype=jnp.int32) * tm
        tile_expert = jnp.minimum(
            jnp.searchsorted(padded_ends, tile_starts, side="right"), E - 1
        ).astype(jnp.int32)
        tile_rows = jnp.clip(real_ends[tile_expert] - tile_starts, 0, tm).astype(jnp.int32)

        # --- fused grouped GEMM -> SiLU*mul*rw -> grouped GEMM (Pallas) ---
        y_pad = moe_grouped_gemm(
            tile_expert, tile_rows, x_pad, rw_pad,
            self.w_gate_up, self.w_down_t,
            token_tile=tm, inter_tile=self.inter_tile,
            out_dtype=self.compute_dtype)                                     # (T_pad, H)

        # --- unpermute + top-k combine (routing weight already applied) ---
        inv_dest = jnp.zeros((TK,), jnp.int32).at[sort_idx].set(dest)
        y_gathered = y_pad[inv_dest].reshape(T, K, H).astype(jnp.float32)
        out = y_gathered.sum(axis=1).astype(hidden_states.dtype)
        return out.reshape(B, S, H), logits


# ----------------------------- Reference (pure jnp) --------------------------


def reference_forward(block, hidden_states):
    """Same forward semantics, dense per-top-k path, same (bf16) params."""
    B, S, H = hidden_states.shape
    x = hidden_states.reshape(-1, H)
    xc = x.astype(block.compute_dtype)
    logits = jnp.dot(xc, block.gate_t, preferred_element_type=jnp.float32)
    probs = jax.nn.softmax(logits, axis=-1)
    rw, sel = lax.top_k(probs, block.top_k)
    if block.norm_topk_prob:
        rw = rw / jnp.sum(rw, axis=-1, keepdims=True)
    rw = rw.astype(jnp.float32)

    out = jnp.zeros((x.shape[0], H), jnp.float32)
    for k in range(block.top_k):
        e = sel[:, k]
        wg = block.w_gate_t[e]                                  # (T, H, I)
        wu = block.w_up_t[e]                                    # (T, H, I)
        wd = block.w_down_t[e]                                  # (T, I, H)
        gate = jnp.einsum("th,thi->ti", xc, wg, preferred_element_type=jnp.float32)
        up = jnp.einsum("th,thi->ti", xc, wu, preferred_element_type=jnp.float32)
        inter = (gate * jax.nn.sigmoid(gate) * up).astype(block.compute_dtype)
        y2 = jnp.einsum("ti,tih->th", inter, wd, preferred_element_type=jnp.float32)
        out = out + rw[:, k][:, None] * y2
    return out.reshape(B, S, H).astype(hidden_states.dtype), logits


# ----------------------------- main -------------------------------------------


if __name__ == "__main__":
    batch_size = 2
    seq_len = 8
    hidden_size = 128
    moe_intermediate_size = 64
    num_experts = 8
    top_k = 2
    norm_topk_prob = True

    key = jax.random.PRNGKey(0)
    k_gate, k_gu, k_down, k_x = jax.random.split(key, 4)

    gate = jax.random.normal(k_gate, (num_experts, hidden_size), jnp.float32) * 0.05
    gate_up_proj = jax.random.normal(
        k_gu, (num_experts, 2 * moe_intermediate_size, hidden_size), jnp.float32) * 0.05
    down_proj = jax.random.normal(
        k_down, (num_experts, hidden_size, moe_intermediate_size), jnp.float32) * 0.05
    hidden_states = jax.random.normal(
        k_x, (batch_size, seq_len, hidden_size), jnp.float32)

    block = Qwen3MoeFusedGroupedGEMMBlockPallas(
        num_experts, top_k, hidden_size, moe_intermediate_size, norm_topk_prob,
        gate, gate_up_proj, down_proj,
        token_tile=16,                      # tiny tile for the demo; use 256+ (≈tokens/expert) for real shapes
        compute_dtype=jnp.bfloat16)

    out, router_logits_out = block(hidden_states)
    out = jax.block_until_ready(out)
    router_logits_out = jax.block_until_ready(router_logits_out)

    ref_out, ref_logits = reference_forward(block, hidden_states)
    assert jnp.allclose(router_logits_out, ref_logits, rtol=2e-3, atol=2e-3), \
        "router logits mismatch"
    assert jnp.allclose(out, ref_out, rtol=2e-2, atol=5e-3), "moe output mismatch"

    print("KERNEL_OK")
</pallas_src>

<mosaic_0001>
module attributes {stable_mosaic.version = 11 : i64} {
  func.func @_router_kernel(%arg0: i32, %arg1: memref<16x128xbf16, #tpu.memory_space<vmem>>, %arg2: memref<128x8xbf16, #tpu.memory_space<vmem>>, %arg3: memref<16x8xf32, #tpu.memory_space<vmem>>) attributes {dimension_semantics = [#tpu.dimension_semantics<parallel>], iteration_bounds = array<i64: 1>, scalar_prefetch = 0 : i64, scratch_operands = 0 : i64, tpu.core_type = #tpu.core_type<tc>, window_params = [{transform_indices = @transform_0, window_bounds = array<i64: 16, 128>}, {pipeline_mode = #tpu.pipeline_mode<synchronous>, transform_indices = @transform_1, window_bounds = array<i64: 128, 8>}, {transform_indices = @transform_2, window_bounds = array<i64: 16, 8>}]} {
    %c0 = arith.constant 0 : index
    %c0_0 = arith.constant 0 : index
    %0 = vector.load %arg1[%c0, %c0_0] : memref<16x128xbf16, #tpu.memory_space<vmem>>, vector<16x128xbf16>
    %c0_1 = arith.constant 0 : index
    %c0_2 = arith.constant 0 : index
    %1 = vector.load %arg2[%c0_1, %c0_2] : memref<128x8xbf16, #tpu.memory_space<vmem>>, vector<128x8xbf16>
    %cst = arith.constant dense<0.000000e+00> : vector<16x8xf32>
    %2 = tpu.matmul %0, %1, %cst {dimension_numbers = #tpu.dot_dimension_numbers<[1], [0], [0], [1], [0, 0, 1, 1], [], []>} : vector<16x128xbf16>, vector<128x8xbf16>, vector<16x8xf32> -> vector<16x8xf32>
    %c0_3 = arith.constant 0 : index
    %c0_4 = arith.constant 0 : index
    %3 = vector.load %arg3[%c0_3, %c0_4] : memref<16x8xf32, #tpu.memory_space<vmem>>, vector<16x8xf32>
    tpu.vector_store %arg3[%c0_3, %c0_4], %2 {strides = array<i32>} : memref<16x8xf32, #tpu.memory_space<vmem>>, vector<16x8xf32>,
    return
  }
  func.func @transform_0(%arg0: i32) -> (i32, i32) {
    %c0_i32 = arith.constant 0 : i32
    %c0_i32_0 = arith.constant 0 : i32
    return %arg0, %c0_i32 : i32, i32
  }
  func.func @transform_1(%arg0: i32) -> (i32, i32) {
    %c0_i32 = arith.constant 0 : i32
    %c0_i32_0 = arith.constant 0 : i32
    %c0_i32_1 = arith.constant 0 : i32
    return %c0_i32, %c0_i32_0 : i32, i32
  }
  func.func @transform_2(%arg0: i32) -> (i32, i32) {
    %c0_i32 = arith.constant 0 : i32
    %c0_i32_0 = arith.constant 0 : i32
    return %arg0, %c0_i32 : i32, i32
  }
}

</mosaic_0001>

<llo_original>
// kernel: tpu_custom_call.1
$region0: #{tpu_custom_call.1}
  #allocation0 [shape = 'u32[]', space=smem, size = 0x4, offset = 0x4, fixed_abs, tag = 'smem constant byte address 0x4 - core index']
  #allocation1 [shape = 'u32[144,128]{1,0:T(1,128)}', space=vmem, size = 0x12000, scoped, tag = 'internal scratch']
  %s0 = inlined_call_operand.vmem [shape: bf16[16,128], index: 0, kind: input, shape index: {}]
  %s1 = inlined_call_operand.vmem [shape: bf16[128,8], index: 1, kind: input, shape index: {}]
  %s2 = inlined_call_operand.vmem [shape: f32[16,8], index: 2, kind: output, shape index: {}]
  %s3 = sld [smem:[#allocation0]]
  $region18: #{tpu_custom_call.1} parent=0
    _
  %s5 = ssub.s32 1, %s3
  %s6 = scalar_select 0, %s5, %s3
  // Predicated region
  $region2: #{tpu_custom_call.1} parent=0 // pred_check
    _
  $region3: #{tpu_custom_call.1} parent=0 // pred_check_branch
    %8 = sbr.rel (0) target = $region5
  $region4: #{tpu_custom_call.1} parent=0 // pred_region
    _
  $region5: #{tpu_custom_call.1} parent=0 // pred_fallthru
    _
  // Predicated region
  $region6: #{tpu_custom_call.1} parent=0 // pred_check
    _
  $region7: #{tpu_custom_call.1} parent=0 // pred_check_branch
    %10 = sbr.rel (0) target = $region9
  $region8: #{tpu_custom_call.1} parent=0 // pred_region
    _
  $region9: #{tpu_custom_call.1} parent=0 // pred_fallthru
    _
  %v12 = vld [vmem:[%s0] sm:$0xf]
  %v13 = vld [vmem:[%s0 + $0x4] sm:$0xf]
  %v14 = vld [vmem:[%s1] sm:$0xf]
  %v15 = vld [vmem:[%s1 + $0x4] sm:$0xf]
  %v16 = vld [vmem:[%s1 + $0x8] sm:$0xf]
  %v17 = vld [vmem:[%s1 + $0xc] sm:$0xf]
  %v18 = vld [vmem:[%s1 + $0x10] sm:$0xf]
  %v19 = vld [vmem:[%s1 + $0x14] sm:$0xf]
  %v20 = vld [vmem:[%s1 + $0x18] sm:$0xf]
  %v21 = vld [vmem:[%s1 + $0x1c] sm:$0xf]
  %v22 = vld [vmem:[%s1 + $0x20] sm:$0xf]
  %v23 = vld [vmem:[%s1 + $0x24] sm:$0xf]
  %v24 = vld [vmem:[%s1 + $0x28] sm:$0xf]
  %v25 = vld [vmem:[%s1 + $0x2c] sm:$0xf]
  %v26 = vld [vmem:[%s1 + $0x30] sm:$0xf]
  %v27 = vld [vmem:[%s1 + $0x34] sm:$0xf]
  %v28 = vld [vmem:[%s1 + $0x38] sm:$0xf]
  %v29 = vld [vmem:[%s1 + $0x3c] sm:$0xf]
  %v32 = vunpack.c.l.b16 %v12
  %v33 = vunpack.c.l.b16 %v13
  %v34 = vpack.c.b16 %v33, %v32
  %v52 = vunpack.c.l.b16 %v14
  %v53 = vunpack.c.l.b16 %v15
  %v54 = vunpack.c.l.b16 %v16
  %v55 = vunpack.c.l.b16 %v17
  %v56 = vunpack.c.l.b16 %v18
  %v57 = vunpack.c.l.b16 %v19
  %v58 = vunpack.c.l.b16 %v20
  %v59 = vunpack.c.l.b16 %v21
  %v60 = vunpack.c.l.b16 %v22
  %v61 = vunpack.c.l.b16 %v23
  %v62 = vunpack.c.l.b16 %v24
  %v63 = vunpack.c.l.b16 %v25
  %v64 = vunpack.c.l.b16 %v26
  %v65 = vunpack.c.l.b16 %v27
  %v66 = vunpack.c.l.b16 %v28
  %v67 = vunpack.c.l.b16 %v29
  %v68 = vpack.c.b16 %v53, %v52
  %v69 = vpack.c.b16 %v55, %v54
  %v70 = vpack.c.b16 %v57, %v56
  %v71 = vpack.c.b16 %v59, %v58
  %v72 = vpack.c.b16 %v61, %v60
  %v73 = vpack.c.b16 %v63, %v62
  %v74 = vpack.c.b16 %v65, %v64
  %v75 = vpack.c.b16 %v67, %v66
  %84 = vmatprep.subr.bf16.mxu0 0
  %85 = vmatpush1.bf16.msra.mxu0 %v68
  %86 = vmatprep.subr.bf16.mxu0 0
  %87 = vmatpush1.bf16.msra.mxu0 %v69
  %88 = vmatprep.subr.bf16.mxu0 0
  %89 = vmatpush1.bf16.msra.mxu0 %v70
  %90 = vmatprep.subr.bf16.mxu0 0
  %91 = vmatpush1.bf16.msra.mxu0 %v71
  %92 = vmatprep.subr.bf16.mxu0 0
  %93 = vmatpush1.bf16.msra.mxu0 %v72
  %94 = vmatprep.subr.bf16.mxu0 0
  %95 = vmatpush1.bf16.msra.mxu0 %v73
  %96 = vmatprep.subr.bf16.mxu0 0
  %97 = vmatpush1.bf16.msra.mxu0 %v74
  %98 = vmatprep.subr.bf16.mxu0 0
  %99 = vmatpush1.bf16.msra.mxu0 %v75
  %100 = vmatprep.subr.bf16.mxu0 0
  %101 = vmatpush1.bf16.msra.mxu0 0
  %102 = vmatprep.subr.bf16.mxu0 0
  %103 = vmatpush1.bf16.msra.mxu0 0
  %104 = vmatprep.subr.bf16.mxu0 0
  %105 = vmatpush1.bf16.msra.mxu0 0
  %106 = vmatprep.subr.bf16.mxu0 0
  %107 = vmatpush1.bf16.msra.mxu0 0
  %108 = vmatprep.subr.bf16.mxu0 0
  %109 = vmatpush1.bf16.msra.mxu0 0
  %110 = vmatprep.subr.bf16.mxu0 0
  %111 = vmatpush1.bf16.msra.mxu0 0
  %112 = vmatprep.subr.bf16.mxu0 0
  %113 = vmatpush1.bf16.msra.mxu0 0
  %114 = vmatprep.subr.bf16.mxu0 0
  %115 = vmatpush1.bf16.msra.mxu0 0
  %116 = vmatprep.mubr.bf16.mxu0 0
  %117 = vmatmul.mubr.bf16.gmra.mrb[0].mxu0 %v34
  %v118 = vpop.f32.mrb[0].mxu0
  %v119 = vadd.f32 0.0, %v118
  %v120 = vpop.f32.mrb[0].mxu0
  %v121 = vpop.f32.mrb[0].mxu0
  %v122 = vadd.f32 0.0, %v121
  %v123 = vpop.f32.mrb[0].mxu0
  %124 = vdwg.mxu0
  %vm125 = vcmask 64512
  %126 = vst.msk [vmem:[%s2] sm:$0xff] %vm125, %v119
  %127 = vst.msk [vmem:[%s2 + $0x8] sm:$0xff] %vm125, %v122
  // Predicated region
  $region10: #{tpu_custom_call.1} parent=0 // pred_check
    _
  $region11: #{tpu_custom_call.1} parent=0 // pred_check_branch
    %129 = sbr.rel (0) target = $region13
  $region12: #{tpu_custom_call.1} parent=0 // pred_region
    _
  $region13: #{tpu_custom_call.1} parent=0 // pred_fallthru
    _
  // Predicated region
  $region14: #{tpu_custom_call.1} parent=0 // pred_check
    _
  $region15: #{tpu_custom_call.1} parent=0 // pred_check_branch
    %131 = sbr.rel (0) target = $region17
  $region16: #{tpu_custom_call.1} parent=0 // pred_region
    _
  $region17: #{tpu_custom_call.1} parent=0 // pred_fallthru
    _

</llo_original>
